<compile_context>
chip_gen: v7x
topology: tpu7x:2x2x1
jax: 0.10.0
libtpu: 0.0.40
codegen_flags: <defaults>
</compile_context>

<pallas_src>
import functools
import warnings

import jax
import jax.numpy as jnp
from jax.experimental import pallas as pl
from jax.experimental.pallas import tpu as pltpu

# Donation "not usable" notices are perf hints, not errors; keep stderr clean.
warnings.filterwarnings("ignore", message=".*donat.*")


def _round_up(x, m):
    return ((x + m - 1) // m) * m


def _cdiv(a, b):
    return -(-a // b)


def _num_tensorcores():
    """Best-effort TensorCores-per-chip count. Fails safe to 1 (no forced grid split)."""
    try:
        kind = jax.devices()[0].device_kind.lower()
    except Exception:
        return 1
    if "v4" in kind or "v5p" in kind or "v7" in kind or "tpu7" in kind:
        return 2
    return 1


def _plan_layout(total, dtypes, target_block_bytes, num_tc):
    """Lane-dense (rows, lanes) slab + row-block size for an elementwise kernel."""
    itemsize = max(jnp.dtype(d).itemsize for d in dtypes)
    pack = max(32 // jnp.dtype(d).itemsize for d in dtypes)  # 8 f32, 16 bf16, 32 int8
    if total % 128 == 0:
        # Pure-bitcast reshape: largest multiple of 128 (<= 1024) that divides total.
        lanes = 128
        for cand in range(1024, 127, -128):
            if total % cand == 0:
                lanes = cand
                break
        rows = total // lanes
        padded_total = total
    else:
        # Rare fallback: minimal pad to a 128-lane slab (one extra pass over the data).
        lanes = 128
        rows = _cdiv(total, lanes)
        padded_total = rows * lanes
    block_rows = (target_block_bytes // (lanes * itemsize)) // pack * pack
    block_rows = max(block_rows, pack)
    if num_tc > 1 and rows > pack:
        # Dual-TC chips only: make >= num_tc near-equal, pack-aligned blocks.
        per_core = _round_up(_cdiv(rows, num_tc), pack)
        block_rows = min(block_rows, per_core)
    if block_rows >= rows:
        block_rows = rows  # one full block; block_shape == array dims is always legal
    grid_rows = _cdiv(rows, block_rows)
    return lanes, rows, padded_total, block_rows, grid_rows


# ----------------------------------------------------------------------------- kernels


def _lif_step_kernel(dv_ref, v_ref, spike_ref, v_next_ref, *,
                     v_threshold, v_reset, reciprocal_tau):
    dv = dv_ref[...].astype(jnp.float32)
    v = v_ref[...].astype(jnp.float32)
    h = v + reciprocal_tau * (dv - v + v_reset)  # membrane charge (f32 compute)
    mask = h >= v_threshold
    spike_ref[...] = mask.astype(spike_ref.dtype)
    v_next_ref[...] = jnp.where(mask, v_reset, h).astype(v_next_ref.dtype)


def _lif_fused_kernel(dv_ref, v0_ref, spike_ref, v_final_ref, v_scr, *,
                      v_threshold, v_reset, reciprocal_tau):
    t = pl.program_id(1)

    @pl.when(t == 0)
    def _():
        v_scr[...] = v0_ref[...].astype(jnp.float32)

    dv = dv_ref[...].astype(jnp.float32)
    v = v_scr[...]
    h = v + reciprocal_tau * (dv - v + v_reset)
    mask = h >= v_threshold
    spike_ref[...] = mask.astype(spike_ref.dtype)
    v_next = jnp.where(mask, v_reset, h)
    v_scr[...] = v_next                                  # state stays resident in VMEM
    v_final_ref[...] = v_next.astype(v_final_ref.dtype)  # HBM writeback only at block end


# ----------------------------------------------------------------------------- wrappers


@functools.partial(
    jax.jit,
    static_argnames=("v_threshold", "v_reset", "tau", "spike_dtype",
                     "target_block_bytes"),
    donate_argnums=(1,))
def lif_hard_reset_forward(dv, v, *, v_threshold=1.0, v_reset=0.0, tau=100.0,
                           spike_dtype=None,
                           target_block_bytes=4 * 1024 * 1024):
    """One LIF hard-reset step. dv, v: same shape/dtype. Returns (spike, v_next)."""
    assert dv.shape == v.shape and dv.dtype == v.dtype
    orig_shape = dv.shape
    total = dv.size
    out_spike_dtype = dv.dtype if spike_dtype is None else jnp.dtype(spike_dtype)
    lanes, rows, padded_total, block_rows, grid_rows = _plan_layout(
        total, (dv.dtype, v.dtype, out_spike_dtype), target_block_bytes,
        _num_tensorcores())

    def to_slab(x, fill):
        flat = x.reshape(-1)
        if padded_total != total:
            flat = jnp.pad(flat, (0, padded_total - total), constant_values=fill)
        return flat.reshape(rows, lanes)

    dv2 = to_slab(dv, 0.0)
    v2 = to_slab(v, v_reset)  # pad the state with v_reset, never with 0

    item = jnp.dtype(dv.dtype).itemsize
    s_item = jnp.dtype(out_spike_dtype).itemsize
    cost = pl.CostEstimate(flops=6 * padded_total, transcendentals=0,
                           bytes_accessed=padded_total * (3 * item + s_item))

    kernel = functools.partial(
        _lif_step_kernel, v_threshold=float(v_threshold),
        v_reset=float(v_reset), reciprocal_tau=1.0 / float(tau))
    block = (block_rows, lanes)
    spike2, v_next2 = pl.pallas_call(
        kernel,
        out_shape=(jax.ShapeDtypeStruct((rows, lanes), out_spike_dtype),
                   jax.ShapeDtypeStruct((rows, lanes), dv.dtype)),
        grid_spec=pltpu.PrefetchScalarGridSpec(
            num_scalar_prefetch=0,
            grid=(grid_rows,),
            in_specs=[pl.BlockSpec(block, lambda i: (i, 0)),
                      pl.BlockSpec(block, lambda i: (i, 0))],
            out_specs=[pl.BlockSpec(block, lambda i: (i, 0)),
                       pl.BlockSpec(block, lambda i: (i, 0))]),
        # v (donated input 1) is updated in place into v_next (output 1).
        input_output_aliases={1: 1},
        compiler_params=pltpu.CompilerParams(
            dimension_semantics=("parallel",),
            vmem_limit_bytes=48 * 1024 * 1024),
        cost_estimate=cost,
    )(dv2, v2)

    def from_slab(y):
        flat = y.reshape(-1)
        if padded_total != total:
            flat = flat[:total]
        return flat.reshape(orig_shape)

    return from_slab(spike2), from_slab(v_next2)


@functools.partial(
    jax.jit,
    static_argnames=("v_threshold", "v_reset", "tau", "spike_dtype",
                     "target_block_bytes"),
    donate_argnums=(1,))
def lif_hard_reset_multi_step(dv_seq, v0, *, v_threshold=1.0, v_reset=0.0,
                              tau=100.0, spike_dtype=None,
                              target_block_bytes=4 * 1024 * 1024):
    """Fused T-step LIF: dv_seq [T, ...], v0 [...]. Returns (spikes [T, ...], v_final).

    v stays resident in VMEM across the T (innermost, "arbitrary") grid axis, so HBM
    traffic per step is only dv in + spike out.
    """
    T = dv_seq.shape[0]
    assert dv_seq.shape[1:] == v0.shape and dv_seq.dtype == v0.dtype
    step_shape = v0.shape
    total = v0.size
    out_spike_dtype = dv_seq.dtype if spike_dtype is None else jnp.dtype(spike_dtype)
    lanes, rows, padded_total, block_rows, grid_rows = _plan_layout(
        total, (dv_seq.dtype, v0.dtype, out_spike_dtype), target_block_bytes,
        _num_tensorcores())

    dv2 = dv_seq.reshape(T, -1)
    v02 = v0.reshape(-1)
    if padded_total != total:
        dv2 = jnp.pad(dv2, ((0, 0), (0, padded_total - total)))
        v02 = jnp.pad(v02, (0, padded_total - total), constant_values=v_reset)
    dv2 = dv2.reshape(T, rows, lanes)
    v02 = v02.reshape(rows, lanes)

    item = jnp.dtype(dv_seq.dtype).itemsize
    s_item = jnp.dtype(out_spike_dtype).itemsize
    cost = pl.CostEstimate(
        flops=6 * padded_total * T, transcendentals=0,
        bytes_accessed=padded_total * (T * (item + s_item) + 2 * item))

    kernel = functools.partial(
        _lif_fused_kernel, v_threshold=float(v_threshold),
        v_reset=float(v_reset), reciprocal_tau=1.0 / float(tau))
    spikes2, v_final2 = pl.pallas_call(
        kernel,
        out_shape=(jax.ShapeDtypeStruct((T, rows, lanes), out_spike_dtype),
                   jax.ShapeDtypeStruct((rows, lanes), v0.dtype)),
        grid_spec=pltpu.PrefetchScalarGridSpec(
            num_scalar_prefetch=0,
            grid=(grid_rows, T),  # T innermost: membrane state stays resident
            in_specs=[
                pl.BlockSpec((None, block_rows, lanes), lambda i, t: (t, i, 0)),
                pl.BlockSpec((block_rows, lanes), lambda i, t: (i, 0)),
            ],
            out_specs=[
                pl.BlockSpec((None, block_rows, lanes), lambda i, t: (t, i, 0)),
                pl.BlockSpec((block_rows, lanes), lambda i, t: (i, 0)),
            ],
            scratch_shapes=[pltpu.VMEM((block_rows, lanes), jnp.float32)]),
        input_output_aliases={1: 1},  # v0 (donated) -> v_final, in place
        compiler_params=pltpu.CompilerParams(
            dimension_semantics=("parallel", "arbitrary"),
            vmem_limit_bytes=48 * 1024 * 1024),
        cost_estimate=cost,
    )(dv2, v02)

    spikes = spikes2.reshape(T, padded_total)
    v_final = v_final2.reshape(padded_total)
    if padded_total != total:
        spikes = spikes[:, :total]
        v_final = v_final[:total]
    return spikes.reshape((T,) + step_shape), v_final.reshape(step_shape)


class LIFNodeJax:
    """Minimal stateful wrapper mirroring LIFNode.forward (eval path)."""

    def __init__(self, tau=100.0, v_threshold=1.0, v_reset=0.0, spike_dtype=None):
        self.tau = tau
        self.v_threshold = v_threshold
        self.v_reset = v_reset
        self.spike_dtype = spike_dtype  # pass jnp.int8 / jnp.bfloat16 to cut HBM bytes
        self.v = self.v_reset           # scalar state until first call (BaseNode.reset)

    def reset(self):
        self.v = self.v_reset

    def __call__(self, dv):
        if not isinstance(self.v, jnp.ndarray):
            self.v = jnp.full(dv.shape, self.v_reset, dtype=dv.dtype)
        spike, self.v = lif_hard_reset_forward(
            dv, self.v, v_threshold=self.v_threshold, v_reset=self.v_reset,
            tau=self.tau, spike_dtype=self.spike_dtype)
        return spike


def _reference_lif(dv, v, v_threshold, v_reset, tau):
    h = v + (1.0 / tau) * (dv - v + v_reset)
    spike = (h >= v_threshold).astype(dv.dtype)
    v_next = jnp.where(spike > 0, v_reset, h)
    return spike, v_next


if __name__ == "__main__":
    key = jax.random.PRNGKey(0)
    # small shape consistent with a conv-feature-map input: [N, C, H, W]
    x = jax.random.normal(key, (2, 4, 16, 16), dtype=jnp.float32) * 150.0

    # --- single-step stateful module (matches LIFNode.forward eval path) ---
    node = LIFNodeJax(tau=100.0, v_threshold=1.0, v_reset=0.0)
    spike1 = node(x)          # first step (v starts at v_reset)
    spike2 = node(x * 0.5)    # second step exercises the carried state
    jax.block_until_ready((spike1, spike2, node.v))

    ref_v = jnp.zeros_like(x)
    ref_s1, ref_v = _reference_lif(x, ref_v, 1.0, 0.0, 100.0)
    ref_s2, ref_v = _reference_lif(x * 0.5, ref_v, 1.0, 0.0, 100.0)
    assert jnp.allclose(spike1, ref_s1)
    assert jnp.allclose(spike2, ref_s2)
    assert jnp.allclose(node.v, ref_v, atol=1e-6)

    # --- fused time loop: T steps in one pallas_call, v resident in VMEM ---
    T = 4
    keys = jax.random.split(key, T)
    dv_seq = jnp.stack(
        [jax.random.normal(k, x.shape, dtype=jnp.float32) * 150.0 for k in keys])
    v0 = jnp.zeros_like(x)    # donated into the call; not used afterwards
    spikes, v_final = lif_hard_reset_multi_step(
        dv_seq, v0, v_threshold=1.0, v_reset=0.0, tau=100.0)
    jax.block_until_ready((spikes, v_final))

    rv = jnp.zeros_like(x)
    ref_spikes = []
    for t in range(T):
        rs, rv = _reference_lif(dv_seq[t], rv, 1.0, 0.0, 100.0)
        ref_spikes.append(rs)
    assert jnp.allclose(spikes, jnp.stack(ref_spikes))
    assert jnp.allclose(v_final, rv, atol=1e-6)

    print("KERNEL_OK")
</pallas_src>

<mosaic_0001>
module attributes {stable_mosaic.version = 11 : i64} {
  func.func @_lif_step_kernel(%arg0: i32, %arg1: memref<2x1024xf32, #tpu.memory_space<vmem>>, %arg2: memref<2x1024xf32, #tpu.memory_space<vmem>>, %arg3: memref<2x1024xf32, #tpu.memory_space<vmem>>, %arg4: memref<2x1024xf32, #tpu.memory_space<vmem>>) attributes {dimension_semantics = [#tpu.dimension_semantics<parallel>], iteration_bounds = array<i64: 1>, scalar_prefetch = 0 : i64, scratch_operands = 0 : i64, tpu.core_type = #tpu.core_type<tc>, window_params = [{transform_indices = @transform_0, window_bounds = array<i64: 2, 1024>}, {transform_indices = @transform_1, window_bounds = array<i64: 2, 1024>}, {transform_indices = @transform_2, window_bounds = array<i64: 2, 1024>}, {transform_indices = @transform_3, window_bounds = array<i64: 2, 1024>}]} {
    %c0 = arith.constant 0 : index
    %c0_0 = arith.constant 0 : index
    %0 = vector.load %arg1[%c0, %c0_0] : memref<2x1024xf32, #tpu.memory_space<vmem>>, vector<2x1024xf32>
    %c0_1 = arith.constant 0 : index
    %c0_2 = arith.constant 0 : index
    %1 = vector.load %arg2[%c0_1, %c0_2] : memref<2x1024xf32, #tpu.memory_space<vmem>>, vector<2x1024xf32>
    %2 = arith.subf %0, %1 : vector<2x1024xf32>
    %cst = arith.constant 0.000000e+00 : f32
    %3 = vector.broadcast %cst : f32 to vector<2x1024xf32>
    %4 = arith.addf %2, %3 : vector<2x1024xf32>
    %cst_3 = arith.constant 0.00999999977 : f32
    %5 = vector.broadcast %cst_3 : f32 to vector<2x1024xf32>
    %6 = arith.mulf %5, %4 : vector<2x1024xf32>
    %7 = arith.addf %1, %6 : vector<2x1024xf32>
    %cst_4 = arith.constant 1.000000e+00 : f32
    %8 = vector.broadcast %cst_4 : f32 to vector<2x1024xf32>
    %9 = arith.cmpf oge, %7, %8 : vector<2x1024xf32>
    %10 = arith.extui %9 : vector<2x1024xi1> to vector<2x1024xi32>
    %11 = arith.sitofp %10 : vector<2x1024xi32> to vector<2x1024xf32>
    %c0_5 = arith.constant 0 : index
    %c0_6 = arith.constant 0 : index
    %12 = vector.load %arg3[%c0_5, %c0_6] : memref<2x1024xf32, #tpu.memory_space<vmem>>, vector<2x1024xf32>
    tpu.vector_store %arg3[%c0_5, %c0_6], %11 {strides = array<i32>} : memref<2x1024xf32, #tpu.memory_space<vmem>>, vector<2x1024xf32>,
    %cst_7 = arith.constant 0.000000e+00 : f32
    %13 = vector.broadcast %cst_7 : f32 to vector<2x1024xf32>
    %14 = arith.select %9, %13, %7 : vector<2x1024xi1>, vector<2x1024xf32>
    %c0_8 = arith.constant 0 : index
    %c0_9 = arith.constant 0 : index
    %15 = vector.load %arg4[%c0_8, %c0_9] : memref<2x1024xf32, #tpu.memory_space<vmem>>, vector<2x1024xf32>
    tpu.vector_store %arg4[%c0_8, %c0_9], %14 {strides = array<i32>} : memref<2x1024xf32, #tpu.memory_space<vmem>>, vector<2x1024xf32>,
    return
  }
  func.func @transform_0(%arg0: i32) -> (i32, i32) {
    %c0_i32 = arith.constant 0 : i32
    %c0_i32_0 = arith.constant 0 : i32
    return %arg0, %c0_i32 : i32, i32
  }
  func.func @transform_1(%arg0: i32) -> (i32, i32) {
    %c0_i32 = arith.constant 0 : i32
    %c0_i32_0 = arith.constant 0 : i32
    return %arg0, %c0_i32 : i32, i32
  }
  func.func @transform_2(%arg0: i32) -> (i32, i32) {
    %c0_i32 = arith.constant 0 : i32
    %c0_i32_0 = arith.constant 0 : i32
    return %arg0, %c0_i32 : i32, i32
  }
  func.func @transform_3(%arg0: i32) -> (i32, i32) {
    %c0_i32 = arith.constant 0 : i32
    %c0_i32_0 = arith.constant 0 : i32
    return %arg0, %c0_i32 : i32, i32
  }
}

</mosaic_0001>

<llo_original>
// kernel: lif_hard_reset_forward.1
$region0: #{lif_hard_reset_forward.1}
  #allocation0 [shape = 'u32[]', space=smem, size = 0x4, offset = 0x4, fixed_abs, tag = 'smem constant byte address 0x4 - core index']
  #allocation1 [shape = 'u32[144,128]{1,0:T(1,128)}', space=vmem, size = 0x12000, scoped, tag = 'internal scratch']
  %s0 = inlined_call_operand.vmem [shape: f32[2,1024], index: 0, kind: input, shape index: {}]
  %s1 = inlined_call_operand.vmem [shape: f32[2,1024], index: 1, kind: input, shape index: {}, may-alias: {1,3}]
  %s2 = inlined_call_operand.vmem [shape: f32[2,1024], index: 2, kind: output, shape index: {0}]
  %s3 = inlined_call_operand.vmem [shape: f32[2,1024], index: 3, kind: output, shape index: {1}, may-alias: {1,3}]
  %4 = xla_tuple %s2, %s3
  %s5 = sld [smem:[#allocation0]]
  $region26: #{lif_hard_reset_forward.1} parent=0
    _
  %s7 = ssub.s32 1, %s5
  %s8 = scalar_select 0, %s7, %s5
  // Predicated region
  $region2: #{lif_hard_reset_forward.1} parent=0 // pred_check
    _
  $region3: #{lif_hard_reset_forward.1} parent=0 // pred_check_branch
    %10 = sbr.rel (0) target = $region5
  $region4: #{lif_hard_reset_forward.1} parent=0 // pred_region
    _
  $region5: #{lif_hard_reset_forward.1} parent=0 // pred_fallthru
    _
  // Predicated region
  $region6: #{lif_hard_reset_forward.1} parent=0 // pred_check
    _
  $region7: #{lif_hard_reset_forward.1} parent=0 // pred_check_branch
    %12 = sbr.rel (0) target = $region9
  $region8: #{lif_hard_reset_forward.1} parent=0 // pred_region
    _
  $region9: #{lif_hard_reset_forward.1} parent=0 // pred_fallthru
    _
  %v13 = vld [vmem:[%s0] sm:$0xff]
  %v14 = vld [vmem:[%s0 + $0x8] sm:$0xff]
  %v15 = vld [vmem:[%s1] sm:$0xff]
  %v16 = vld [vmem:[%s1 + $0x8] sm:$0xff]
  %v17 = vsub.f32 %v13, %v15
  %v18 = vsub.f32 %v14, %v16
  %v19 = vadd.f32 %v17, 0.0
  %v20 = vadd.f32 %v18, 0.0
  %v21 = vmul.f32 %v19, 0.01
  %v22 = vmul.f32 %v20, 0.01
  %v23 = vadd.f32 %v15, %v21
  %v24 = vadd.f32 %v16, %v22
  %vm25 = vcmp.ge.f32.partialorder %v23, 1.0
  %vm26 = vcmp.ge.f32.partialorder %v24, 1.0
  %v27 = vsel %vm25, 1, 0
  %v28 = vsel %vm26, 1, 0
  %v29 = vcvt.s32.f32 %v27
  %v30 = vcvt.s32.f32 %v28
  %31 = vst [vmem:[%s2] sm:$0xff] %v29
  %32 = vst [vmem:[%s2 + $0x8] sm:$0xff] %v30
  %v33 = vsel %vm25, 0.0, %v23
  %v34 = vsel %vm26, 0.0, %v24
  %35 = vst [vmem:[%s3] sm:$0xff] %v33
  %36 = vst [vmem:[%s3 + $0x8] sm:$0xff] %v34
  // Predicated region
  $region10: #{lif_hard_reset_forward.1} parent=0 // pred_check
    _
  $region11: #{lif_hard_reset_forward.1} parent=0 // pred_check_branch
    %38 = sbr.rel (0) target = $region13
  $region12: #{lif_hard_reset_forward.1} parent=0 // pred_region
    _
  $region13: #{lif_hard_reset_forward.1} parent=0 // pred_fallthru
    _
  // Predicated region
  $region14: #{lif_hard_reset_forward.1} parent=0 // pred_check
    _
  $region15: #{lif_hard_reset_forward.1} parent=0 // pred_check_branch
    %40 = sbr.rel (0) target = $region17
  $region16: #{lif_hard_reset_forward.1} parent=0 // pred_region
    _
  $region17: #{lif_hard_reset_forward.1} parent=0 // pred_fallthru
    _
  // Predicated region
  $region18: #{lif_hard_reset_forward.1} parent=0 // pred_check
    _
  $region19: #{lif_hard_reset_forward.1} parent=0 // pred_check_branch
    %42 = sbr.rel (0) target = $region21
  $region20: #{lif_hard_reset_forward.1} parent=0 // pred_region
    _
  $region21: #{lif_hard_reset_forward.1} parent=0 // pred_fallthru
    _
  // Predicated region
  $region22: #{lif_hard_reset_forward.1} parent=0 // pred_check
    _
  $region23: #{lif_hard_reset_forward.1} parent=0 // pred_check_branch
    %44 = sbr.rel (0) target = $region25
  $region24: #{lif_hard_reset_forward.1} parent=0 // pred_region
    _
  $region25: #{lif_hard_reset_forward.1} parent=0 // pred_fallthru
    _

</llo_original>
